<compile_context>
chip_gen: v7x
topology: tpu7x:2x2x1
jax: 0.10.0
libtpu: 0.0.40
codegen_flags: <defaults>
</compile_context>

<pallas_src>
import functools

import jax
import jax.numpy as jnp
from jax.experimental import pallas as pl
from jax.experimental.pallas import tpu as pltpu

LANE = 128      # vreg lane width
SUB = 8         # f32 sublane count
TB_MAX = 1024   # batch tile cap (well under v7x 64 MiB VMEM even double-buffered)


def _round_up(x, m):
    return (x + m - 1) // m * m


def _layout(n_observations, n_hidden, n_actions):
    """Row offsets of each parameter segment inside the packed (rows, W) block."""
    n_obs_p = _round_up(max(n_observations, 1), LANE)
    hp = _round_up(max(n_hidden, 1), LANE)
    ap = _round_up(max(n_actions, 1), LANE)
    w = max(hp, ap)                      # common lane width for all activations
    off_w1 = 0                           # (n_obs_p, w)
    off_b1 = off_w1 + n_obs_p            # (SUB, w) bias in row 0
    off_w2 = off_b1 + SUB                # (w, w)
    off_b2 = off_w2 + w                  # (SUB, w)
    off_w3 = off_b2 + SUB                # (w, w)
    off_b3 = off_w3 + w                  # (SUB, w)
    rows = off_b3 + SUB
    return dict(n_obs_p=n_obs_p, w=w, rows=rows,
                off_w1=off_w1, off_b1=off_b1, off_w2=off_w2,
                off_b2=off_b2, off_w3=off_w3, off_b3=off_b3)


def pack_params(params, n_observations, n_hidden, n_actions):
    """Pack (w1,b1,w2,b2,w3,b3) [w:(in,out), b:(1,out)] into one padded f32 block.

    Zero padding is exact: tanh(0) == 0, so padded lanes stay 0 through all
    three layers and the wrapper just slices [:, :n_actions] at the end.
    """
    w1, b1, w2, b2, w3, b3 = params
    L = _layout(n_observations, n_hidden, n_actions)
    p = jnp.zeros((L["rows"], L["w"]), jnp.float32)
    p = p.at[L["off_w1"]:L["off_w1"] + n_observations, :n_hidden].set(w1.astype(jnp.float32))
    p = p.at[L["off_b1"], :n_hidden].set(b1.reshape(-1).astype(jnp.float32))
    p = p.at[L["off_w2"]:L["off_w2"] + n_hidden, :n_hidden].set(w2.astype(jnp.float32))
    p = p.at[L["off_b2"], :n_hidden].set(b2.reshape(-1).astype(jnp.float32))
    p = p.at[L["off_w3"]:L["off_w3"] + n_hidden, :n_actions].set(w3.astype(jnp.float32))
    p = p.at[L["off_b3"], :n_actions].set(b3.reshape(-1).astype(jnp.float32))
    return p


def _dqn_kernel(x_ref, p_ref, out_ref, *, layout):
    L = layout
    x = x_ref[...]
    if x.dtype != jnp.float32:           # torch does x.to(float32); skip if already f32
        x = x.astype(jnp.float32)

    # Static, sublane-aligned slices into the single packed parameter block.
    w1 = p_ref[L["off_w1"]:L["off_w1"] + L["n_obs_p"], :]
    b1 = p_ref[L["off_b1"]:L["off_b1"] + 1, :]
    w2 = p_ref[L["off_w2"]:L["off_w2"] + L["w"], :]
    b2 = p_ref[L["off_b2"]:L["off_b2"] + 1, :]
    w3 = p_ref[L["off_w3"]:L["off_w3"] + L["w"], :]
    b3 = p_ref[L["off_b3"]:L["off_b3"] + 1, :]

    h1 = jnp.tanh(jnp.dot(x, w1, preferred_element_type=jnp.float32) + b1)
    h2 = jnp.tanh(jnp.dot(h1, w2, preferred_element_type=jnp.float32) + b2)
    q = jnp.dot(h2, w3, preferred_element_type=jnp.float32) + b3
    out_ref[...] = q.astype(out_ref.dtype)   # lane-dense (TB, 128) store


@functools.partial(jax.jit, static_argnames=("n_observations", "n_hidden", "n_actions"))
def dqn_forward(x, packed_params, n_observations, n_hidden, n_actions):
    """x: (B, n_observations); packed_params from pack_params(). Returns (B, n_actions) f32."""
    L = _layout(n_observations, n_hidden, n_actions)
    B = x.shape[0]
    W = L["w"]
    n_obs_p = L["n_obs_p"]

    # Batch tile: sublane-aligned, capped; grid over batch with resident weights.
    tb = min(_round_up(B, SUB), TB_MAX)
    b_p = _round_up(B, tb)
    grid = (b_p // tb,)

    # Pad input to lane-dense (b_p, n_obs_p); padded lanes hit zero weight rows.
    x_pad = jnp.zeros((b_p, n_obs_p), jnp.float32)
    x_pad = x_pad.at[:B, :n_observations].set(x.astype(jnp.float32))

    flops = 2 * b_p * (n_obs_p * W + W * W + W * W)
    transcendentals = 2 * b_p * W
    bytes_accessed = 4 * (b_p * n_obs_p + L["rows"] * W + b_p * W)

    out = pl.pallas_call(
        functools.partial(_dqn_kernel, layout=L),
        out_shape=jax.ShapeDtypeStruct((b_p, W), jnp.float32),
        grid=grid,
        in_specs=[
            pl.BlockSpec((tb, n_obs_p), lambda i: (i, 0),
                         memory_space=pltpu.MemorySpace.VMEM),
            # Constant block index -> single DMA, weights stay resident in VMEM.
            pl.BlockSpec((L["rows"], W), lambda i: (0, 0),
                         memory_space=pltpu.MemorySpace.VMEM),
        ],
        out_specs=pl.BlockSpec((tb, W), lambda i: (i, 0),
                               memory_space=pltpu.MemorySpace.VMEM),
        compiler_params=pltpu.CompilerParams(
            dimension_semantics=("parallel",),
        ),
        cost_estimate=pl.CostEstimate(
            flops=flops,
            transcendentals=transcendentals,
            bytes_accessed=bytes_accessed,
        ),
    )(x_pad, packed_params)

    # TODO(synk): for very large batches on v6e/v7x, cast x / packed weights to bf16
    # (f32 accumulate) to hit the fast MXU path; kept f32 here for bit-tight parity.
    return out[:B, :n_actions]


def init_params(key, n_observations, n_hidden, n_actions):
    """Deterministic init mimicking nn.Linear's U(-1/sqrt(fan_in), 1/sqrt(fan_in))."""
    keys = jax.random.split(key, 6)

    def linear(kw, kb, fan_in, fan_out):
        bound = 1.0 / jnp.sqrt(jnp.float32(fan_in))
        w = jax.random.uniform(kw, (fan_in, fan_out), jnp.float32, -bound, bound)
        b = jax.random.uniform(kb, (1, fan_out), jnp.float32, -bound, bound)
        return w, b

    w1, b1 = linear(keys[0], keys[1], n_observations, n_hidden)
    w2, b2 = linear(keys[2], keys[3], n_hidden, n_hidden)
    w3, b3 = linear(keys[4], keys[5], n_hidden, n_actions)
    return (w1, b1, w2, b2, w3, b3)


if __name__ == "__main__":
    # Small, module-consistent shapes: batch=8, n_observations=32, n_hidden=32, n_actions=8
    batch, n_obs, n_hidden, n_actions = 8, 32, 32, 8

    key = jax.random.PRNGKey(0)
    k_x, k_p = jax.random.split(key)

    x = jax.random.normal(k_x, (batch, n_obs), jnp.float32)
    params = init_params(k_p, n_obs, n_hidden, n_actions)

    # Pack weights once (amortized across calls); run Pallas kernel.
    packed = pack_params(params, n_obs, n_hidden, n_actions)
    q = dqn_forward(x, packed, n_observations=n_obs, n_hidden=n_hidden, n_actions=n_actions)
    q = jax.block_until_ready(q)

    # Pure-JAX reference for sanity.
    w1, b1, w2, b2, w3, b3 = params
    h = jnp.tanh(x @ w1 + b1)
    h = jnp.tanh(h @ w2 + b2)
    q_ref = h @ w3 + b3

    assert q.shape == (batch, n_actions)
    assert jnp.allclose(q, q_ref, atol=1e-5, rtol=1e-5), "mismatch vs reference"

    print("KERNEL_OK")
</pallas_src>

<mosaic_0001>
module attributes {stable_mosaic.version = 11 : i64} {
  func.func @_dqn_kernel(%arg0: i32, %arg1: memref<8x128xf32, #tpu.memory_space<vmem>>, %arg2: memref<408x128xf32, #tpu.memory_space<vmem>>, %arg3: memref<8x128xf32, #tpu.memory_space<vmem>>) attributes {dimension_semantics = [#tpu.dimension_semantics<parallel>], iteration_bounds = array<i64: 1>, scalar_prefetch = 0 : i64, scratch_operands = 0 : i64, tpu.core_type = #tpu.core_type<tc>, window_params = [{transform_indices = @transform_0, window_bounds = array<i64: 8, 128>}, {pipeline_mode = #tpu.pipeline_mode<synchronous>, transform_indices = @transform_1, window_bounds = array<i64: 408, 128>}, {transform_indices = @transform_2, window_bounds = array<i64: 8, 128>}]} {
    %c0 = arith.constant 0 : index
    %c0_0 = arith.constant 0 : index
    %0 = vector.load %arg1[%c0, %c0_0] : memref<8x128xf32, #tpu.memory_space<vmem>>, vector<8x128xf32>
    %c0_1 = arith.constant 0 : index
    %c0_2 = arith.constant 0 : index
    %1 = vector.load %arg2[%c0_1, %c0_2] : memref<408x128xf32, #tpu.memory_space<vmem>>, vector<128x128xf32>
    %c128 = arith.constant 128 : index
    %c0_3 = arith.constant 0 : index
    %2 = vector.load %arg2[%c128, %c0_3] : memref<408x128xf32, #tpu.memory_space<vmem>>, vector<1x128xf32>
    %c136 = arith.constant 136 : index
    %c0_4 = arith.constant 0 : index
    %3 = vector.load %arg2[%c136, %c0_4] : memref<408x128xf32, #tpu.memory_space<vmem>>, vector<128x128xf32>
    %c264 = arith.constant 264 : index
    %c0_5 = arith.constant 0 : index
    %4 = vector.load %arg2[%c264, %c0_5] : memref<408x128xf32, #tpu.memory_space<vmem>>, vector<1x128xf32>
    %c272 = arith.constant 272 : index
    %c0_6 = arith.constant 0 : index
    %5 = vector.load %arg2[%c272, %c0_6] : memref<408x128xf32, #tpu.memory_space<vmem>>, vector<128x128xf32>
    %c400 = arith.constant 400 : index
    %c0_7 = arith.constant 0 : index
    %6 = vector.load %arg2[%c400, %c0_7] : memref<408x128xf32, #tpu.memory_space<vmem>>, vector<1x128xf32>
    %cst = arith.constant dense<0.000000e+00> : vector<8x128xf32>
    %7 = tpu.matmul %0, %1, %cst {dimension_numbers = #tpu.dot_dimension_numbers<[1], [0], [0], [1], [0, 0, 1, 1], [], []>} : vector<8x128xf32>, vector<128x128xf32>, vector<8x128xf32> -> vector<8x128xf32>
    %8 = vector.broadcast %2 : vector<1x128xf32> to vector<8x128xf32>
    %9 = arith.addf %7, %8 : vector<8x128xf32>
    %10 = math.tanh %9 : vector<8x128xf32>
    %cst_8 = arith.constant dense<0.000000e+00> : vector<8x128xf32>
    %11 = tpu.matmul %10, %3, %cst_8 {dimension_numbers = #tpu.dot_dimension_numbers<[1], [0], [0], [1], [0, 0, 1, 1], [], []>} : vector<8x128xf32>, vector<128x128xf32>, vector<8x128xf32> -> vector<8x128xf32>
    %12 = vector.broadcast %4 : vector<1x128xf32> to vector<8x128xf32>
    %13 = arith.addf %11, %12 : vector<8x128xf32>
    %14 = math.tanh %13 : vector<8x128xf32>
    %cst_9 = arith.constant dense<0.000000e+00> : vector<8x128xf32>
    %15 = tpu.matmul %14, %5, %cst_9 {dimension_numbers = #tpu.dot_dimension_numbers<[1], [0], [0], [1], [0, 0, 1, 1], [], []>} : vector<8x128xf32>, vector<128x128xf32>, vector<8x128xf32> -> vector<8x128xf32>
    %16 = vector.broadcast %6 : vector<1x128xf32> to vector<8x128xf32>
    %17 = arith.addf %15, %16 : vector<8x128xf32>
    %c0_10 = arith.constant 0 : index
    %c0_11 = arith.constant 0 : index
    %18 = vector.load %arg3[%c0_10, %c0_11] : memref<8x128xf32, #tpu.memory_space<vmem>>, vector<8x128xf32>
    tpu.vector_store %arg3[%c0_10, %c0_11], %17 {strides = array<i32>} : memref<8x128xf32, #tpu.memory_space<vmem>>, vector<8x128xf32>,
    return
  }
  func.func @transform_0(%arg0: i32) -> (i32, i32) {
    %c0_i32 = arith.constant 0 : i32
    %c0_i32_0 = arith.constant 0 : i32
    return %arg0, %c0_i32 : i32, i32
  }
  func.func @transform_1(%arg0: i32) -> (i32, i32) {
    %c0_i32 = arith.constant 0 : i32
    %c0_i32_0 = arith.constant 0 : i32
    %c0_i32_1 = arith.constant 0 : i32
    return %c0_i32, %c0_i32_0 : i32, i32
  }
  func.func @transform_2(%arg0: i32) -> (i32, i32) {
    %c0_i32 = arith.constant 0 : i32
    %c0_i32_0 = arith.constant 0 : i32
    return %arg0, %c0_i32 : i32, i32
  }
}

</mosaic_0001>

<llo_original>
// kernel: dqn_forward.1
$region0: #{dqn_forward.1}
  #allocation0 [shape = 'u32[]', space=smem, size = 0x4, offset = 0x4, fixed_abs, tag = 'smem constant byte address 0x4 - core index']
  #allocation1 [shape = 'u32[144,128]{1,0:T(1,128)}', space=vmem, size = 0x12000, scoped, tag = 'internal scratch']
  %s0 = inlined_call_operand.vmem [shape: f32[8,128], index: 0, kind: input, shape index: {}]
  %s1 = inlined_call_operand.hbm [shape: f32[408,128], index: 1, kind: input, shape index: {}]
  %s2 = inlined_call_operand.hbm [shape: f32[8,128], index: 2, kind: output, shape index: {}]
  %s3 = sld [smem:[#allocation0]]
  $region22: #{dqn_forward.1} parent=0
    _
  %s5 = ssub.s32 1, %s3
  %s6 = scalar_select 0, %s5, %s3
  $region1: #{dqn_forward.1} parent=0
    #allocation2 [shape = 'u8[208896]{0}', space=vmem, size = 0x33000, scoped, tag = 'input window, operand 1, single buffered']
    #allocation3 [shape = 's32[1]{0}', space=sflag, size = 0x4, scoped, tag = 'scoped memory for dqn_forward.1']
    #allocation4 [shape = 's32[1]{0}', space=sflag, size = 0x4, scoped, tag = 'scoped memory for dqn_forward.1']
    #allocation5 [shape = 'u8[4096]{0}', space=vmem, size = 0x1000, scoped, tag = 'output window, operand 0, single buffered']
    %7 = vsyncpa [#allocation3], 0
    %8 = vsyncpa [#allocation4], 0
    // Predicated region
    $region2: #{dqn_forward.1} parent=1 // pred_check
      _
    $region3: #{dqn_forward.1} parent=1 // pred_check_branch
      %10 = sbr.rel (0) target = $region5
    $region4: #{dqn_forward.1} parent=1 // pred_region
      _
    $region5: #{dqn_forward.1} parent=1 // pred_fallthru
      _
    // Predicated region
    $region6: #{dqn_forward.1} parent=1 // pred_check
      _
    $region7: #{dqn_forward.1} parent=1 // pred_check_branch
      %12 = sbr.rel (0) target = $region9
    $region8: #{dqn_forward.1} parent=1 // pred_region
      %s14 = ssub.s32 6528, 6528
      %15 = vsyncadd [#allocation3], %s14
      %s16 = sshll.u32 [#allocation2], 4
      %s17 = int_to_ptr.vmem [resolvable:$true] %s16
      %22 = dma.hbm_to_vmem [thread:$0]  %s1, 6528, %s17, [#allocation3], 128, 128, 8
    $region9: #{dqn_forward.1} parent=1 // pred_fallthru
      _
    // Predicated region
    $region10: #{dqn_forward.1} parent=1 // pred_check
      _
    $region11: #{dqn_forward.1} parent=1 // pred_check_branch
      %24 = sbr.rel (0) target = $region13
    $region12: #{dqn_forward.1} parent=1 // pred_region
      %25 = dma.done [#allocation3], 6528
    $region13: #{dqn_forward.1} parent=1 // pred_fallthru
      _
    %v26 = vld [vmem:[%s0] sm:$0xff]
    %v27 = vld [vmem:[#allocation2] sm:$0xff]
    %v28 = vld [vmem:[#allocation2 + $0x8] sm:$0xff]
    %v29 = vld [vmem:[#allocation2 + $0x10] sm:$0xff]
    %v30 = vld [vmem:[#allocation2 + $0x18] sm:$0xff]
    %v31 = vld [vmem:[#allocation2 + $0x20] sm:$0xff]
    %v32 = vld [vmem:[#allocation2 + $0x28] sm:$0xff]
    %v33 = vld [vmem:[#allocation2 + $0x30] sm:$0xff]
    %v34 = vld [vmem:[#allocation2 + $0x38] sm:$0xff]
    %v35 = vld [vmem:[#allocation2 + $0x40] sm:$0xff]
    %v36 = vld [vmem:[#allocation2 + $0x48] sm:$0xff]
    %v37 = vld [vmem:[#allocation2 + $0x50] sm:$0xff]
    %v38 = vld [vmem:[#allocation2 + $0x58] sm:$0xff]
    %v39 = vld [vmem:[#allocation2 + $0x60] sm:$0xff]
    %v40 = vld [vmem:[#allocation2 + $0x68] sm:$0xff]
    %v41 = vld [vmem:[#allocation2 + $0x70] sm:$0xff]
    %v42 = vld [vmem:[#allocation2 + $0x78] sm:$0xff]
    %v43 = vld [vmem:[#allocation2 + $0x80] sm:$0x1]
    %v44 = vld [vmem:[#allocation2 + $0x88] sm:$0xff]
    %v45 = vld [vmem:[#allocation2 + $0x90] sm:$0xff]
    %v46 = vld [vmem:[#allocation2 + $0x98] sm:$0xff]
    %v47 = vld [vmem:[#allocation2 + $0xa0] sm:$0xff]
    %v48 = vld [vmem:[#allocation2 + $0xa8] sm:$0xff]
    %v49 = vld [vmem:[#allocation2 + $0xb0] sm:$0xff]
    %v50 = vld [vmem:[#allocation2 + $0xb8] sm:$0xff]
    %v51 = vld [vmem:[#allocation2 + $0xc0] sm:$0xff]
    %v52 = vld [vmem:[#allocation2 + $0xc8] sm:$0xff]
    %v53 = vld [vmem:[#allocation2 + $0xd0] sm:$0xff]
    %v54 = vld [vmem:[#allocation2 + $0xd8] sm:$0xff]
    %v55 = vld [vmem:[#allocation2 + $0xe0] sm:$0xff]
    %v56 = vld [vmem:[#allocation2 + $0xe8] sm:$0xff]
    %v57 = vld [vmem:[#allocation2 + $0xf0] sm:$0xff]
    %v58 = vld [vmem:[#allocation2 + $0xf8] sm:$0xff]
    %v59 = vld [vmem:[#allocation2 + $0x100] sm:$0xff]
    %v60 = vld [vmem:[#allocation2 + $0x108] sm:$0x1]
    %v61 = vld [vmem:[#allocation2 + $0x110] sm:$0xff]
    %v62 = vld [vmem:[#allocation2 + $0x118] sm:$0xff]
    %v63 = vld [vmem:[#allocation2 + $0x120] sm:$0xff]
    %v64 = vld [vmem:[#allocation2 + $0x128] sm:$0xff]
    %v65 = vld [vmem:[#allocation2 + $0x130] sm:$0xff]
    %v66 = vld [vmem:[#allocation2 + $0x138] sm:$0xff]
    %v67 = vld [vmem:[#allocation2 + $0x140] sm:$0xff]
    %v68 = vld [vmem:[#allocation2 + $0x148] sm:$0xff]
    %v69 = vld [vmem:[#allocation2 + $0x150] sm:$0xff]
    %v70 = vld [vmem:[#allocation2 + $0x158] sm:$0xff]
    %v71 = vld [vmem:[#allocation2 + $0x160] sm:$0xff]
    %v72 = vld [vmem:[#allocation2 + $0x168] sm:$0xff]
    %v73 = vld [vmem:[#allocation2 + $0x170] sm:$0xff]
    %v74 = vld [vmem:[#allocation2 + $0x178] sm:$0xff]
    %v75 = vld [vmem:[#allocation2 + $0x180] sm:$0xff]
    %v76 = vld [vmem:[#allocation2 + $0x188] sm:$0xff]
    %v77 = vld [vmem:[#allocation2 + $0x190] sm:$0x1]
    %v78 = vlaneseq
    %v79 = vshrl.u32 %v78, 7
    %v80 = vsub.s32 0, %v79
    %v81 = vrot.slane %v43, %v80
    %82 = vmatprep.subr.mxu0 0.0
    %83 = vmatpush1.msra.mxu0 %v27
    %84 = vmatprep.subr.mxu0 0.0
    %85 = vmatpush1.msra.mxu0 %v28
    %86 = vmatprep.subr.mxu0 0.0
    %87 = vmatpush1.msra.mxu0 %v29
    %88 = vmatprep.subr.mxu0 0.0
    %89 = vmatpush1.msra.mxu0 %v30
    %90 = vmatprep.subr.mxu0 0.0
    %91 = vmatpush1.msra.mxu0 %v31
    %92 = vmatprep.subr.mxu0 0.0
    %93 = vmatpush1.msra.mxu0 %v32
    %94 = vmatprep.subr.mxu0 0.0
    %95 = vmatpush1.msra.mxu0 %v33
    %96 = vmatprep.subr.mxu0 0.0
    %97 = vmatpush1.msra.mxu0 %v34
    %98 = vmatprep.subr.mxu0 0.0
    %99 = vmatpush1.msra.mxu0 %v35
    %100 = vmatprep.subr.mxu0 0.0
    %101 = vmatpush1.msra.mxu0 %v36
    %102 = vmatprep.subr.mxu0 0.0
    %103 = vmatpush1.msra.mxu0 %v37
    %104 = vmatprep.subr.mxu0 0.0
    %105 = vmatpush1.msra.mxu0 %v38
    %106 = vmatprep.subr.mxu0 0.0
    %107 = vmatpush1.msra.mxu0 %v39
    %108 = vmatprep.subr.mxu0 0.0
    %109 = vmatpush1.msra.mxu0 %v40
    %110 = vmatprep.subr.mxu0 0.0
    %111 = vmatpush1.msra.mxu0 %v41
    %112 = vmatprep.subr.mxu0 0.0
    %113 = vmatpush1.msra.mxu0 %v42
    %114 = vmatprep.subr.mxu0 0.0
    %115 = vmatpush1.msra.mxu0 0.0
    %116 = vmatprep.subr.mxu0 0.0
    %117 = vmatpush1.msra.mxu0 0.0
    %118 = vmatprep.subr.mxu0 0.0
    %119 = vmatpush1.msra.mxu0 0.0
    %120 = vmatprep.subr.mxu0 0.0
    %121 = vmatpush1.msra.mxu0 0.0
    %122 = vmatprep.subr.mxu0 0.0
    %123 = vmatpush1.msra.mxu0 0.0
    %124 = vmatprep.subr.mxu0 0.0
    %125 = vmatpush1.msra.mxu0 0.0
    %126 = vmatprep.subr.mxu0 0.0
    %127 = vmatpush1.msra.mxu0 0.0
    %128 = vmatprep.subr.mxu0 0.0
    %129 = vmatpush1.msra.mxu0 0.0
    %130 = vmatprep.subr.mxu0 0.0
    %131 = vmatpush1.msra.mxu0 0.0
    %132 = vmatprep.subr.mxu0 0.0
    %133 = vmatpush1.msra.mxu0 0.0
    %134 = vmatprep.subr.mxu0 0.0
    %135 = vmatpush1.msra.mxu0 0.0
    %136 = vmatprep.subr.mxu0 0.0
    %137 = vmatpush1.msra.mxu0 0.0
    %138 = vmatprep.subr.mxu0 0.0
    %139 = vmatpush1.msra.mxu0 0.0
    %140 = vmatprep.subr.mxu0 0.0
    %141 = vmatpush1.msra.mxu0 0.0
    %142 = vmatprep.subr.mxu0 0.0
    %143 = vmatpush1.msra.mxu0 0.0
    %144 = vmatprep.subr.mxu0 0.0
    %145 = vmatpush1.msra.mxu0 0.0
    %146 = vmatprep.mubr.f32.mxu0 0.0
    %147 = vmatmul.mubr.f32.gmra.mrb[0].mxu0 %v26
    %v148 = vpop.f32.mrb[0].mxu0
    %v149 = vadd.f32 %v81, %v148
    %v150 = vpop.f32.mrb[0].mxu0
    %151 = vdwg.mxu0
    %v152 = vtanh.pop %v149
    %v153 = vlaneseq
    %v154 = vshrl.u32 %v153, 7
    %v155 = vsub.s32 0, %v154
    %v156 = vrot.slane %v60, %v155
    %157 = vmatprep.subr.mxu0 0.0
    %158 = vmatpush1.msra.mxu0 %v44
    %159 = vmatprep.subr.mxu0 0.0
    %160 = vmatpush1.msra.mxu0 %v45
    %161 = vmatprep.subr.mxu0 0.0
    %162 = vmatpush1.msra.mxu0 %v46
    %163 = vmatprep.subr.mxu0 0.0
    %164 = vmatpush1.msra.mxu0 %v47
    %165 = vmatprep.subr.mxu0 0.0
    %166 = vmatpush1.msra.mxu0 %v48
    %167 = vmatprep.subr.mxu0 0.0
    %168 = vmatpush1.msra.mxu0 %v49
    %169 = vmatprep.subr.mxu0 0.0
    %170 = vmatpush1.msra.mxu0 %v50
    %171 = vmatprep.subr.mxu0 0.0
    %172 = vmatpush1.msra.mxu0 %v51
    %173 = vmatprep.subr.mxu0 0.0
    %174 = vmatpush1.msra.mxu0 %v52
    %175 = vmatprep.subr.mxu0 0.0
    %176 = vmatpush1.msra.mxu0 %v53
    %177 = vmatprep.subr.mxu0 0.0
    %178 = vmatpush1.msra.mxu0 %v54
    %179 = vmatprep.subr.mxu0 0.0
    %180 = vmatpush1.msra.mxu0 %v55
    %181 = vmatprep.subr.mxu0 0.0
    %182 = vmatpush1.msra.mxu0 %v56
    %183 = vmatprep.subr.mxu0 0.0
    %184 = vmatpush1.msra.mxu0 %v57
    %185 = vmatprep.subr.mxu0 0.0
    %186 = vmatpush1.msra.mxu0 %v58
    %187 = vmatprep.subr.mxu0 0.0
    %188 = vmatpush1.msra.mxu0 %v59
    %189 = vmatprep.subr.mxu0 0.0
    %190 = vmatpush1.msra.mxu0 0.0
    %191 = vmatprep.subr.mxu0 0.0
    %192 = vmatpush1.msra.mxu0 0.0
    %193 = vmatprep.subr.mxu0 0.0
    %194 = vmatpush1.msra.mxu0 0.0
    %195 = vmatprep.subr.mxu0 0.0
    %196 = vmatpush1.msra.mxu0 0.0
    %197 = vmatprep.subr.mxu0 0.0
    %198 = vmatpush1.msra.mxu0 0.0
    %199 = vmatprep.subr.mxu0 0.0
    %200 = vmatpush1.msra.mxu0 0.0
    %201 = vmatprep.subr.mxu0 0.0
    %202 = vmatpush1.msra.mxu0 0.0
    %203 = vmatprep.subr.mxu0 0.0
    %204 = vmatpush1.msra.mxu0 0.0
    %205 = vmatprep.subr.mxu0 0.0
    %206 = vmatpush1.msra.mxu0 0.0
    %207 = vmatprep.subr.mxu0 0.0
    %208 = vmatpush1.msra.mxu0 0.0
    %209 = vmatprep.subr.mxu0 0.0
    %210 = vmatpush1.msra.mxu0 0.0
    %211 = vmatprep.subr.mxu0 0.0
    %212 = vmatpush1.msra.mxu0 0.0
    %213 = vmatprep.subr.mxu0 0.0
    %214 = vmatpush1.msra.mxu0 0.0
    %215 = vmatprep.subr.mxu0 0.0
    %216 = vmatpush1.msra.mxu0 0.0
    %217 = vmatprep.subr.mxu0 0.0
    %218 = vmatpush1.msra.mxu0 0.0
    %219 = vmatprep.subr.mxu0 0.0
    %220 = vmatpush1.msra.mxu0 0.0
    %221 = vmatprep.mubr.f32.mxu0 0.0
    %222 = vmatmul.mubr.f32.gmra.mrb[0].mxu0 %v152
    %v223 = vpop.f32.mrb[0].mxu0
    %v224 = vadd.f32 %v156, %v223
    %v225 = vpop.f32.mrb[0].mxu0
    %226 = vdwg.mxu0
    %v227 = vtanh.pop %v224
    %v228 = vlaneseq
    %v229 = vshrl.u32 %v228, 7
    %v230 = vsub.s32 0, %v229
    %v231 = vrot.slane %v77, %v230
    %232 = vmatprep.subr.mxu0 0.0
    %233 = vmatpush1.msra.mxu0 %v61
    %234 = vmatprep.subr.mxu0 0.0
    %235 = vmatpush1.msra.mxu0 %v62
    %236 = vmatprep.subr.mxu0 0.0
    %237 = vmatpush1.msra.mxu0 %v63
    %238 = vmatprep.subr.mxu0 0.0
    %239 = vmatpush1.msra.mxu0 %v64
    %240 = vmatprep.subr.mxu0 0.0
    %241 = vmatpush1.msra.mxu0 %v65
    %242 = vmatprep.subr.mxu0 0.0
    %243 = vmatpush1.msra.mxu0 %v66
    %244 = vmatprep.subr.mxu0 0.0
    %245 = vmatpush1.msra.mxu0 %v67
    %246 = vmatprep.subr.mxu0 0.0
    %247 = vmatpush1.msra.mxu0 %v68
    %248 = vmatprep.subr.mxu0 0.0
    %249 = vmatpush1.msra.mxu0 %v69
    %250 = vmatprep.subr.mxu0 0.0
    %251 = vmatpush1.msra.mxu0 %v70
    %252 = vmatprep.subr.mxu0 0.0
    %253 = vmatpush1.msra.mxu0 %v71
    %254 = vmatprep.subr.mxu0 0.0
    %255 = vmatpush1.msra.mxu0 %v72
    %256 = vmatprep.subr.mxu0 0.0
    %257 = vmatpush1.msra.mxu0 %v73
    %258 = vmatprep.subr.mxu0 0.0
    %259 = vmatpush1.msra.mxu0 %v74
    %260 = vmatprep.subr.mxu0 0.0
    %261 = vmatpush1.msra.mxu0 %v75
    %262 = vmatprep.subr.mxu0 0.0
    %263 = vmatpush1.msra.mxu0 %v76
    %264 = vmatprep.subr.mxu0 0.0
    %265 = vmatpush1.msra.mxu0 0.0
    %266 = vmatprep.subr.mxu0 0.0
    %267 = vmatpush1.msra.mxu0 0.0
    %268 = vmatprep.subr.mxu0 0.0
    %269 = vmatpush1.msra.mxu0 0.0
    %270 = vmatprep.subr.mxu0 0.0
    %271 = vmatpush1.msra.mxu0 0.0
    %272 = vmatprep.subr.mxu0 0.0
    %273 = vmatpush1.msra.mxu0 0.0
    %274 = vmatprep.subr.mxu0 0.0
    %275 = vmatpush1.msra.mxu0 0.0
    %276 = vmatprep.subr.mxu0 0.0
    %277 = vmatpush1.msra.mxu0 0.0
    %278 = vmatprep.subr.mxu0 0.0
    %279 = vmatpush1.msra.mxu0 0.0
    %280 = vmatprep.subr.mxu0 0.0
    %281 = vmatpush1.msra.mxu0 0.0
    %282 = vmatprep.subr.mxu0 0.0
    %283 = vmatpush1.msra.mxu0 0.0
    %284 = vmatprep.subr.mxu0 0.0
    %285 = vmatpush1.msra.mxu0 0.0
    %286 = vmatprep.subr.mxu0 0.0
    %287 = vmatpush1.msra.mxu0 0.0
    %288 = vmatprep.subr.mxu0 0.0
    %289 = vmatpush1.msra.mxu0 0.0
    %290 = vmatprep.subr.mxu0 0.0
    %291 = vmatpush1.msra.mxu0 0.0
    %292 = vmatprep.subr.mxu0 0.0
    %293 = vmatpush1.msra.mxu0 0.0
    %294 = vmatprep.subr.mxu0 0.0
    %295 = vmatpush1.msra.mxu0 0.0
    %296 = vmatprep.mubr.f32.mxu0 0.0
    %297 = vmatmul.mubr.f32.gmra.mrb[0].mxu0 %v227
    %v298 = vpop.f32.mrb[0].mxu0
    %v299 = vadd.f32 %v231, %v298
    %v300 = vpop.f32.mrb[0].mxu0
    %301 = vdwg.mxu0
    %302 = vst [vmem:[#allocation5] sm:$0xff] %v299
    // Predicated region
    $region14: #{dqn_forward.1} parent=1 // pred_check
      _
    $region15: #{dqn_forward.1} parent=1 // pred_check_branch
      %304 = sbr.rel (0) target = $region17
    $region16: #{dqn_forward.1} parent=1 // pred_region
      %s306 = ssub.s32 128, 128
      %307 = vsyncadd [#allocation4], %s306
      %s309 = sshll.u32 [#allocation5], 4
      %s310 = int_to_ptr.vmem [resolvable:$true] %s309
      %312 = dma.vmem_to_hbm [thread:$0]  %s310, 128, %s2, [#allocation4]
    $region17: #{dqn_forward.1} parent=1 // pred_fallthru
      _
    // Predicated region
    $region18: #{dqn_forward.1} parent=1 // pred_check
      _
    $region19: #{dqn_forward.1} parent=1 // pred_check_branch
      %314 = sbr.rel (0) target = $region21
    $region20: #{dqn_forward.1} parent=1 // pred_region
      %315 = dma.done [#allocation4], 128
    $region21: #{dqn_forward.1} parent=1 // pred_fallthru
      _
    %316 = vsyncpa [#allocation3], 1
    %317 = vsyncpa [#allocation4], 1

</llo_original>
